<compile_context>
chip_gen: v5e
topology: v5e:2x2
jax: 0.10.0
libtpu: 0.0.40
codegen_flags: <defaults>
</compile_context>

<pallas_src>
import functools

import jax
import jax.numpy as jnp
from jax.experimental import pallas as pl
from jax.experimental.pallas import tpu as pltpu

LANE = 128


def _round_up(n, m):
    return (n + m - 1) // m * m


def _mlp_kernel(x_ref, w1_ref, b1_ref, w2_ref, b2_ref, w3_ref, b3_ref,
                wt_ref, bt_ref, out_ref):
    """Fused forward for one batch tile: 3x (Linear+ReLU) + stacked task heads.

    Matmuls run with bf16 operands / f32 accumulation; bias + ReLU in f32.
    """
    bf = jnp.bfloat16
    h = jnp.dot(x_ref[...].astype(bf), w1_ref[...],
                preferred_element_type=jnp.float32)
    h = jnp.maximum(h + b1_ref[...], 0.0)
    h = jnp.dot(h.astype(bf), w2_ref[...],
                preferred_element_type=jnp.float32)
    h = jnp.maximum(h + b2_ref[...], 0.0)
    h = jnp.dot(h.astype(bf), w3_ref[...],
                preferred_element_type=jnp.float32)
    h = jnp.maximum(h + b3_ref[...], 0.0)
    y = jnp.dot(h.astype(bf), wt_ref[...],
                preferred_element_type=jnp.float32)
    out_ref[...] = (y + bt_ref[...]).astype(out_ref.dtype)


def prepare_params(params):
    """Pads narrow lane dims to 128 (exact zero padding) and casts matmul
    operands to bf16. Biases stay f32 (added in f32 inside the kernel)."""
    num_tasks = params["wt"].shape[1]
    nt_pad = _round_up(num_tasks, LANE)

    w3 = jnp.pad(params["w3"], ((0, 0), (0, LANE - params["w3"].shape[1])))
    b3 = jnp.pad(params["b3"], ((0, 0), (0, LANE - params["b3"].shape[1])))
    wt = jnp.pad(params["wt"], ((0, LANE - params["wt"].shape[0]),
                                (0, nt_pad - num_tasks)))
    bt = jnp.pad(params["bt"], ((0, 0), (0, nt_pad - num_tasks)))

    return {
        "w1": params["w1"].astype(jnp.bfloat16),
        "b1": params["b1"].astype(jnp.float32),
        "w2": params["w2"].astype(jnp.bfloat16),
        "b2": params["b2"].astype(jnp.float32),
        "w3": w3.astype(jnp.bfloat16),
        "b3": b3.astype(jnp.float32),
        "wt": wt.astype(jnp.bfloat16),
        "bt": bt.astype(jnp.float32),
    }


@functools.partial(jax.jit, static_argnames=("num_tasks",))
def multi_task_net_forward(x, prepared, num_tasks):
    """Runs the fused MultiTaskNet forward pass.

    x:        [B, input_size] float32
    prepared: output of prepare_params (bf16 weights, padded head).
    Returns [B, num_tasks] float32 (one column per task head).
    """
    B, F = x.shape
    nt_pad = prepared["wt"].shape[1]

    # Batch tile: multiple of 8 sublanes; 512 rows once the batch is big enough
    # (fills the 256-row MXU on v6e/v7x and amortizes per-step overhead while
    # keeping double-buffered tiles tiny relative to VMEM on all generations).
    TB = 512 if B >= 512 else _round_up(B, 8)
    B_pad = _round_up(B, TB)
    if B_pad != B:
        x = jnp.pad(x, ((0, B_pad - B), (0, 0)))

    grid = (pl.cdiv(B_pad, TB),)

    param_order = ("w1", "b1", "w2", "b2", "w3", "b3", "wt", "bt")
    args = (x,) + tuple(prepared[k] for k in param_order)

    # x / out stream per grid step; weights use a constant block index so they
    # are fetched once and stay resident in VMEM across the whole grid.
    in_specs = [pl.BlockSpec((TB, F), lambda i: (i, 0))]
    in_specs += [pl.BlockSpec(prepared[k].shape, lambda i: (0, 0))
                 for k in param_order]
    out_spec = pl.BlockSpec((TB, nt_pad), lambda i: (i, 0))

    out = pl.pallas_call(
        _mlp_kernel,
        out_shape=jax.ShapeDtypeStruct((B_pad, nt_pad), jnp.float32),
        grid=grid,
        in_specs=in_specs,
        out_specs=out_spec,
        compiler_params=pltpu.CompilerParams(
            dimension_semantics=("parallel",)),
    )(*args)
    return out[:B, :num_tasks]


def init_params(key, input_size, num_tasks=1):
    """Deterministic synthetic parameters with the shapes nn.Linear implies
    (stored as [in_features, out_features] so the kernel computes x @ W + b)."""
    ks = jax.random.split(key, 8)

    def lin(kw, fan_in, fan_out):
        bound = 1.0 / jnp.sqrt(jnp.float32(fan_in))
        return jax.random.uniform(kw, (fan_in, fan_out), jnp.float32,
                                  -bound, bound)

    return {
        "w1": lin(ks[0], input_size, 256),
        "b1": jax.random.uniform(ks[1], (1, 256), jnp.float32, -0.05, 0.05),
        "w2": lin(ks[2], 256, 128),
        "b2": jax.random.uniform(ks[3], (1, 128), jnp.float32, -0.05, 0.05),
        "w3": lin(ks[4], 128, 64),
        "b3": jax.random.uniform(ks[5], (1, 64), jnp.float32, -0.05, 0.05),
        "wt": lin(ks[6], 64, num_tasks),
        "bt": jax.random.uniform(ks[7], (1, num_tasks), jnp.float32, -0.05, 0.05),
    }


def reference_forward_f32(x, p):
    """Plain-JAX f32 reference (module semantics)."""
    h = jnp.maximum(x @ p["w1"] + p["b1"], 0.0)
    h = jnp.maximum(h @ p["w2"] + p["b2"], 0.0)
    h = jnp.maximum(h @ p["w3"] + p["b3"], 0.0)
    return h @ p["wt"] + p["bt"]


def reference_forward_bf16(x, p):
    """Plain-JAX reference mirroring the kernel's bf16-operand / f32-accum math."""
    bf = jnp.bfloat16
    h = jnp.dot(x.astype(bf), p["w1"].astype(bf),
                preferred_element_type=jnp.float32)
    h = jnp.maximum(h + p["b1"], 0.0)
    h = jnp.dot(h.astype(bf), p["w2"].astype(bf),
                preferred_element_type=jnp.float32)
    h = jnp.maximum(h + p["b2"], 0.0)
    h = jnp.dot(h.astype(bf), p["w3"].astype(bf),
                preferred_element_type=jnp.float32)
    h = jnp.maximum(h + p["b3"], 0.0)
    return jnp.dot(h.astype(bf), p["wt"].astype(bf),
                   preferred_element_type=jnp.float32) + p["bt"]


if __name__ == "__main__":
    key = jax.random.PRNGKey(0)
    k_param, k_x1, k_x2 = jax.random.split(key, 3)

    input_size = 32
    num_tasks = 1

    params = init_params(k_param, input_size, num_tasks)
    prepared = prepare_params(params)

    # Small batch (single grid step) and a larger, non-multiple-of-tile batch
    # (exercises the batch grid, resident weights and padding/slicing).
    for batch, k_x in ((8, k_x1), (1000, k_x2)):
        x = jax.random.normal(k_x, (batch, input_size), jnp.float32)

        out = multi_task_net_forward(x, prepared, num_tasks)
        out = jax.block_until_ready(out)
        assert out.shape == (batch, num_tasks)

        # The PyTorch module returns a list of per-task [B, 1] tensors.
        task_outputs = [out[:, t:t + 1] for t in range(num_tasks)]
        assert all(t.shape == (batch, 1) for t in task_outputs)

        ref_bf16 = reference_forward_bf16(x, params)
        ref_f32 = reference_forward_f32(x, params)
        assert jnp.allclose(out, ref_bf16, atol=1e-3, rtol=1e-3)
        assert jnp.allclose(out, ref_f32, atol=5e-2, rtol=5e-2)

    print("KERNEL_OK")
</pallas_src>

<mosaic_0001>
module attributes {stable_mosaic.version = 11 : i64} {
  func.func @_mlp_kernel(%arg0: i32, %arg1: memref<8x32xf32, #tpu.memory_space<vmem>>, %arg2: memref<32x256xbf16, #tpu.memory_space<vmem>>, %arg3: memref<1x256xf32, #tpu.memory_space<vmem>>, %arg4: memref<256x128xbf16, #tpu.memory_space<vmem>>, %arg5: memref<1x128xf32, #tpu.memory_space<vmem>>, %arg6: memref<128x128xbf16, #tpu.memory_space<vmem>>, %arg7: memref<1x128xf32, #tpu.memory_space<vmem>>, %arg8: memref<128x128xbf16, #tpu.memory_space<vmem>>, %arg9: memref<1x128xf32, #tpu.memory_space<vmem>>, %arg10: memref<8x128xf32, #tpu.memory_space<vmem>>) attributes {dimension_semantics = [#tpu.dimension_semantics<parallel>], iteration_bounds = array<i64: 1>, scalar_prefetch = 0 : i64, scratch_operands = 0 : i64, tpu.core_type = #tpu.core_type<tc>, window_params = [{transform_indices = @transform_0, window_bounds = array<i64: 8, 32>}, {pipeline_mode = #tpu.pipeline_mode<synchronous>, transform_indices = @transform_1, window_bounds = array<i64: 32, 256>}, {pipeline_mode = #tpu.pipeline_mode<synchronous>, transform_indices = @transform_2, window_bounds = array<i64: 1, 256>}, {pipeline_mode = #tpu.pipeline_mode<synchronous>, transform_indices = @transform_3, window_bounds = array<i64: 256, 128>}, {pipeline_mode = #tpu.pipeline_mode<synchronous>, transform_indices = @transform_4, window_bounds = array<i64: 1, 128>}, {pipeline_mode = #tpu.pipeline_mode<synchronous>, transform_indices = @transform_5, window_bounds = array<i64: 128, 128>}, {pipeline_mode = #tpu.pipeline_mode<synchronous>, transform_indices = @transform_6, window_bounds = array<i64: 1, 128>}, {pipeline_mode = #tpu.pipeline_mode<synchronous>, transform_indices = @transform_7, window_bounds = array<i64: 128, 128>}, {pipeline_mode = #tpu.pipeline_mode<synchronous>, transform_indices = @transform_8, window_bounds = array<i64: 1, 128>}, {transform_indices = @transform_9, window_bounds = array<i64: 8, 128>}]} {
    %c0 = arith.constant 0 : index
    %c0_0 = arith.constant 0 : index
    %0 = vector.load %arg1[%c0, %c0_0] : memref<8x32xf32, #tpu.memory_space<vmem>>, vector<8x32xf32>
    %1 = arith.truncf %0 : vector<8x32xf32> to vector<8x32xbf16>
    %c0_1 = arith.constant 0 : index
    %c0_2 = arith.constant 0 : index
    %2 = vector.load %arg2[%c0_1, %c0_2] : memref<32x256xbf16, #tpu.memory_space<vmem>>, vector<32x256xbf16>
    %cst = arith.constant dense<0.000000e+00> : vector<8x256xf32>
    %3 = tpu.matmul %1, %2, %cst {dimension_numbers = #tpu.dot_dimension_numbers<[1], [0], [0], [1], [0, 0, 1, 1], [], []>} : vector<8x32xbf16>, vector<32x256xbf16>, vector<8x256xf32> -> vector<8x256xf32>
    %c0_3 = arith.constant 0 : index
    %c0_4 = arith.constant 0 : index
    %4 = vector.load %arg3[%c0_3, %c0_4] : memref<1x256xf32, #tpu.memory_space<vmem>>, vector<1x256xf32>
    %5 = vector.broadcast %4 : vector<1x256xf32> to vector<8x256xf32>
    %6 = arith.addf %3, %5 : vector<8x256xf32>
    %cst_5 = arith.constant 0.000000e+00 : f32
    %7 = vector.broadcast %cst_5 : f32 to vector<8x256xf32>
    %8 = arith.maximumf %6, %7 : vector<8x256xf32>
    %9 = arith.truncf %8 : vector<8x256xf32> to vector<8x256xbf16>
    %c0_6 = arith.constant 0 : index
    %c0_7 = arith.constant 0 : index
    %10 = vector.load %arg4[%c0_6, %c0_7] : memref<256x128xbf16, #tpu.memory_space<vmem>>, vector<256x128xbf16>
    %cst_8 = arith.constant dense<0.000000e+00> : vector<8x128xf32>
    %11 = tpu.matmul %9, %10, %cst_8 {dimension_numbers = #tpu.dot_dimension_numbers<[1], [0], [0], [1], [0, 0, 1, 1], [], []>} : vector<8x256xbf16>, vector<256x128xbf16>, vector<8x128xf32> -> vector<8x128xf32>
    %c0_9 = arith.constant 0 : index
    %c0_10 = arith.constant 0 : index
    %12 = vector.load %arg5[%c0_9, %c0_10] : memref<1x128xf32, #tpu.memory_space<vmem>>, vector<1x128xf32>
    %13 = vector.broadcast %12 : vector<1x128xf32> to vector<8x128xf32>
    %14 = arith.addf %11, %13 : vector<8x128xf32>
    %cst_11 = arith.constant 0.000000e+00 : f32
    %15 = vector.broadcast %cst_11 : f32 to vector<8x128xf32>
    %16 = arith.maximumf %14, %15 : vector<8x128xf32>
    %17 = arith.truncf %16 : vector<8x128xf32> to vector<8x128xbf16>
    %c0_12 = arith.constant 0 : index
    %c0_13 = arith.constant 0 : index
    %18 = vector.load %arg6[%c0_12, %c0_13] : memref<128x128xbf16, #tpu.memory_space<vmem>>, vector<128x128xbf16>
    %cst_14 = arith.constant dense<0.000000e+00> : vector<8x128xf32>
    %19 = tpu.matmul %17, %18, %cst_14 {dimension_numbers = #tpu.dot_dimension_numbers<[1], [0], [0], [1], [0, 0, 1, 1], [], []>} : vector<8x128xbf16>, vector<128x128xbf16>, vector<8x128xf32> -> vector<8x128xf32>
    %c0_15 = arith.constant 0 : index
    %c0_16 = arith.constant 0 : index
    %20 = vector.load %arg7[%c0_15, %c0_16] : memref<1x128xf32, #tpu.memory_space<vmem>>, vector<1x128xf32>
    %21 = vector.broadcast %20 : vector<1x128xf32> to vector<8x128xf32>
    %22 = arith.addf %19, %21 : vector<8x128xf32>
    %cst_17 = arith.constant 0.000000e+00 : f32
    %23 = vector.broadcast %cst_17 : f32 to vector<8x128xf32>
    %24 = arith.maximumf %22, %23 : vector<8x128xf32>
    %25 = arith.truncf %24 : vector<8x128xf32> to vector<8x128xbf16>
    %c0_18 = arith.constant 0 : index
    %c0_19 = arith.constant 0 : index
    %26 = vector.load %arg8[%c0_18, %c0_19] : memref<128x128xbf16, #tpu.memory_space<vmem>>, vector<128x128xbf16>
    %cst_20 = arith.constant dense<0.000000e+00> : vector<8x128xf32>
    %27 = tpu.matmul %25, %26, %cst_20 {dimension_numbers = #tpu.dot_dimension_numbers<[1], [0], [0], [1], [0, 0, 1, 1], [], []>} : vector<8x128xbf16>, vector<128x128xbf16>, vector<8x128xf32> -> vector<8x128xf32>
    %c0_21 = arith.constant 0 : index
    %c0_22 = arith.constant 0 : index
    %28 = vector.load %arg9[%c0_21, %c0_22] : memref<1x128xf32, #tpu.memory_space<vmem>>, vector<1x128xf32>
    %29 = vector.broadcast %28 : vector<1x128xf32> to vector<8x128xf32>
    %30 = arith.addf %27, %29 : vector<8x128xf32>
    %c0_23 = arith.constant 0 : index
    %c0_24 = arith.constant 0 : index
    %31 = vector.load %arg10[%c0_23, %c0_24] : memref<8x128xf32, #tpu.memory_space<vmem>>, vector<8x128xf32>
    tpu.vector_store %arg10[%c0_23, %c0_24], %30 {strides = array<i32>} : memref<8x128xf32, #tpu.memory_space<vmem>>, vector<8x128xf32>,
    return
  }
  func.func @transform_0(%arg0: i32) -> (i32, i32) {
    %c0_i32 = arith.constant 0 : i32
    %c0_i32_0 = arith.constant 0 : i32
    return %arg0, %c0_i32 : i32, i32
  }
  func.func @transform_1(%arg0: i32) -> (i32, i32) {
    %c0_i32 = arith.constant 0 : i32
    %c0_i32_0 = arith.constant 0 : i32
    %c0_i32_1 = arith.constant 0 : i32
    return %c0_i32, %c0_i32_0 : i32, i32
  }
  func.func @transform_2(%arg0: i32) -> (i32, i32) {
    %c0_i32 = arith.constant 0 : i32
    %c0_i32_0 = arith.constant 0 : i32
    %c0_i32_1 = arith.constant 0 : i32
    return %c0_i32, %c0_i32_0 : i32, i32
  }
  func.func @transform_3(%arg0: i32) -> (i32, i32) {
    %c0_i32 = arith.constant 0 : i32
    %c0_i32_0 = arith.constant 0 : i32
    %c0_i32_1 = arith.constant 0 : i32
    return %c0_i32, %c0_i32_0 : i32, i32
  }
  func.func @transform_4(%arg0: i32) -> (i32, i32) {
    %c0_i32 = arith.constant 0 : i32
    %c0_i32_0 = arith.constant 0 : i32
    %c0_i32_1 = arith.constant 0 : i32
    return %c0_i32, %c0_i32_0 : i32, i32
  }
  func.func @transform_5(%arg0: i32) -> (i32, i32) {
    %c0_i32 = arith.constant 0 : i32
    %c0_i32_0 = arith.constant 0 : i32
    %c0_i32_1 = arith.constant 0 : i32
    return %c0_i32, %c0_i32_0 : i32, i32
  }
  func.func @transform_6(%arg0: i32) -> (i32, i32) {
    %c0_i32 = arith.constant 0 : i32
    %c0_i32_0 = arith.constant 0 : i32
    %c0_i32_1 = arith.constant 0 : i32
    return %c0_i32, %c0_i32_0 : i32, i32
  }
  func.func @transform_7(%arg0: i32) -> (i32, i32) {
    %c0_i32 = arith.constant 0 : i32
    %c0_i32_0 = arith.constant 0 : i32
    %c0_i32_1 = arith.constant 0 : i32
    return %c0_i32, %c0_i32_0 : i32, i32
  }
  func.func @transform_8(%arg0: i32) -> (i32, i32) {
    %c0_i32 = arith.constant 0 : i32
    %c0_i32_0 = arith.constant 0 : i32
    %c0_i32_1 = arith.constant 0 : i32
    return %c0_i32, %c0_i32_0 : i32, i32
  }
  func.func @transform_9(%arg0: i32) -> (i32, i32) {
    %c0_i32 = arith.constant 0 : i32
    %c0_i32_0 = arith.constant 0 : i32
    return %arg0, %c0_i32 : i32, i32
  }
}

</mosaic_0001>

<llo_original>
// kernel: multi_task_net_forward.1
$region0: #{multi_task_net_forward.1}
  #allocation0 [shape = 'u32[]', space=smem, size = 0x4, offset = 0x4, fixed_abs, tag = 'smem constant byte address 0x4 - core index']
  #allocation1 [shape = 'u32[72,128]{1,0:T(1,128)}', space=vmem, size = 0x9000, scoped, tag = 'internal scratch']
  %s0 = inlined_call_operand.hbm [shape: f32[8,32], index: 0, kind: input, shape index: {}]
  %s1 = inlined_call_operand.hbm [shape: bf16[32,256], index: 1, kind: input, shape index: {}]
  %s2 = inlined_call_operand.hbm [shape: f32[1,256], index: 2, kind: input, shape index: {}]
  %s3 = inlined_call_operand.hbm [shape: bf16[256,128], index: 3, kind: input, shape index: {}]
  %s4 = inlined_call_operand.vmem [shape: f32[1,128], index: 4, kind: input, shape index: {}]
  %s5 = inlined_call_operand.hbm [shape: bf16[128,128], index: 5, kind: input, shape index: {}]
  %s6 = inlined_call_operand.vmem [shape: f32[1,128], index: 6, kind: input, shape index: {}]
  %s7 = inlined_call_operand.hbm [shape: bf16[128,128], index: 7, kind: input, shape index: {}]
  %s8 = inlined_call_operand.vmem [shape: f32[1,128], index: 8, kind: input, shape index: {}]
  %s9 = inlined_call_operand.vmem [shape: f32[8,128], index: 9, kind: output, shape index: {}]
  %s10 = sld [smem:[#allocation0]]
  $region70: #{multi_task_net_forward.1} parent=0
    _
  %s12 = ssub.s32 1, %s10
  %s13 = scalar_select 0, %s12, %s10
  $region1: #{multi_task_net_forward.1} parent=0
    #allocation2 [shape = 'u8[4096]{0}', space=vmem, size = 0x1000, scoped, tag = 'input window, operand 0, single buffered']
    #allocation3 [shape = 's32[1]{0}', space=sflag, size = 0x4, scoped, tag = 'scoped memory for multi_task_net_forward.1']
    #allocation4 [shape = 'u8[16384]{0}', space=vmem, size = 0x4000, scoped, tag = 'input window, operand 1, single buffered']
    #allocation5 [shape = 's32[1]{0}', space=sflag, size = 0x4, scoped, tag = 'scoped memory for multi_task_net_forward.1']
    #allocation6 [shape = 'u8[1024]{0}', space=vmem, size = 0x400, scoped, tag = 'input window, operand 2, single buffered']
    #allocation7 [shape = 'u8[65536]{0}', space=vmem, size = 0x10000, scoped, tag = 'input window, operand 3, single buffered']
    #allocation8 [shape = 's32[1]{0}', space=sflag, size = 0x4, scoped, tag = 'scoped memory for multi_task_net_forward.1']
    #allocation9 [shape = 'u8[32768]{0}', space=vmem, size = 0x8000, scoped, tag = 'input window, operand 5, single buffered']
    #allocation10 [shape = 'u8[32768]{0}', space=vmem, size = 0x8000, scoped, tag = 'input window, operand 7, single buffered']
    #allocation11 [shape = 's32[1]{0}', space=sflag, size = 0x4, scoped, tag = 'scoped memory for multi_task_net_forward.1']
    %14 = vsyncpa [#allocation3], 0
    %15 = vsyncpa [#allocation5], 0
    %16 = vsyncpa [#allocation8], 0
    %17 = vsyncpa [#allocation11], 0
    // Predicated region
    $region2: #{multi_task_net_forward.1} parent=1 // pred_check
      _
    $region3: #{multi_task_net_forward.1} parent=1 // pred_check_branch
      %19 = sbr.rel (0) target = $region5
    $region4: #{multi_task_net_forward.1} parent=1 // pred_region
      %21 = vsyncadd [#allocation3], 0
      %s23 = sshll.u32 %s0, 4
      %s24 = int_to_ptr.hbm [resolvable:$true] %s23
      %s25 = sshll.u32 [#allocation2], 4
      %s26 = int_to_ptr.vmem [resolvable:$true] %s25
      %28 = dma.hbm_to_vmem [thread:$0]  %s24, 128, %s26, [#allocation3]
    $region5: #{multi_task_net_forward.1} parent=1 // pred_fallthru
      _
    // Predicated region
    $region6: #{multi_task_net_forward.1} parent=1 // pred_check
      _
    $region7: #{multi_task_net_forward.1} parent=1 // pred_check_branch
      %30 = sbr.rel (0) target = $region9
    $region8: #{multi_task_net_forward.1} parent=1 // pred_region
      %32 = vsyncadd [#allocation5], 0
      %s33 = sshll.u32 %s1, 4
      %s34 = int_to_ptr.hbm [resolvable:$true] %s33
      %s35 = sshll.u32 [#allocation4], 4
      %s36 = int_to_ptr.vmem [resolvable:$true] %s35
      %41 = dma.hbm_to_vmem [thread:$0]  %s34, 512, %s36, [#allocation5], 128, 128, 8
    $region9: #{multi_task_net_forward.1} parent=1 // pred_fallthru
      _
    // Predicated region
    $region10: #{multi_task_net_forward.1} parent=1 // pred_check
      _
    $region11: #{multi_task_net_forward.1} parent=1 // pred_check_branch
      %43 = sbr.rel (0) target = $region13
    $region12: #{multi_task_net_forward.1} parent=1 // pred_region
      %45 = vsyncadd [#allocation5], 0
      %s47 = sshll.u32 %s2, 4
      %s48 = int_to_ptr.hbm [resolvable:$true] %s47
      %s49 = sshll.u32 [#allocation6], 4
      %s50 = int_to_ptr.vmem [resolvable:$true] %s49
      %52 = dma.hbm_to_vmem [thread:$0]  %s48, 32, %s50, [#allocation5]
    $region13: #{multi_task_net_forward.1} parent=1 // pred_fallthru
      _
    // Predicated region
    $region14: #{multi_task_net_forward.1} parent=1 // pred_check
      _
    $region15: #{multi_task_net_forward.1} parent=1 // pred_check_branch
      %54 = sbr.rel (0) target = $region17
    $region16: #{multi_task_net_forward.1} parent=1 // pred_region
      %56 = vsyncadd [#allocation8], 0
      %s57 = sshll.u32 %s3, 4
      %s58 = int_to_ptr.hbm [resolvable:$true] %s57
      %s59 = sshll.u32 [#allocation7], 4
      %s60 = int_to_ptr.vmem [resolvable:$true] %s59
      %65 = dma.hbm_to_vmem [thread:$0]  %s58, 2048, %s60, [#allocation8], 64, 64, 4
    $region17: #{multi_task_net_forward.1} parent=1 // pred_fallthru
      _
    // Predicated region
    $region18: #{multi_task_net_forward.1} parent=1 // pred_check
      _
    $region19: #{multi_task_net_forward.1} parent=1 // pred_check_branch
      %67 = sbr.rel (0) target = $region21
    $region20: #{multi_task_net_forward.1} parent=1 // pred_region
      _
    $region21: #{multi_task_net_forward.1} parent=1 // pred_fallthru
      _
    // Predicated region
    $region22: #{multi_task_net_forward.1} parent=1 // pred_check
      _
    $region23: #{multi_task_net_forward.1} parent=1 // pred_check_branch
      %69 = sbr.rel (0) target = $region25
    $region24: #{multi_task_net_forward.1} parent=1 // pred_region
      %71 = vsyncadd [#allocation8], 0
      %s72 = sshll.u32 %s5, 4
      %s73 = int_to_ptr.hbm [resolvable:$true] %s72
      %s74 = sshll.u32 [#allocation9], 4
      %s75 = int_to_ptr.vmem [resolvable:$true] %s74
      %80 = dma.hbm_to_vmem [thread:$0]  %s73, 1024, %s75, [#allocation8], 64, 64, 4
    $region25: #{multi_task_net_forward.1} parent=1 // pred_fallthru
      _
    // Predicated region
    $region26: #{multi_task_net_forward.1} parent=1 // pred_check
      _
    $region27: #{multi_task_net_forward.1} parent=1 // pred_check_branch
      %82 = sbr.rel (0) target = $region29
    $region28: #{multi_task_net_forward.1} parent=1 // pred_region
      _
    $region29: #{multi_task_net_forward.1} parent=1 // pred_fallthru
      _
    // Predicated region
    $region30: #{multi_task_net_forward.1} parent=1 // pred_check
      _
    $region31: #{multi_task_net_forward.1} parent=1 // pred_check_branch
      %84 = sbr.rel (0) target = $region33
    $region32: #{multi_task_net_forward.1} parent=1 // pred_region
      %86 = vsyncadd [#allocation11], 0
      %s87 = sshll.u32 %s7, 4
      %s88 = int_to_ptr.hbm [resolvable:$true] %s87
      %s89 = sshll.u32 [#allocation10], 4
      %s90 = int_to_ptr.vmem [resolvable:$true] %s89
      %95 = dma.hbm_to_vmem [thread:$0]  %s88, 1024, %s90, [#allocation11], 64, 64, 4
    $region33: #{multi_task_net_forward.1} parent=1 // pred_fallthru
      _
    // Predicated region
    $region34: #{multi_task_net_forward.1} parent=1 // pred_check
      _
    $region35: #{multi_task_net_forward.1} parent=1 // pred_check_branch
      %97 = sbr.rel (0) target = $region37
    $region36: #{multi_task_net_forward.1} parent=1 // pred_region
      _
    $region37: #{multi_task_net_forward.1} parent=1 // pred_fallthru
      _
    // Predicated region
    $region38: #{multi_task_net_forward.1} parent=1 // pred_check
      _
    $region39: #{multi_task_net_forward.1} parent=1 // pred_check_branch
      %99 = sbr.rel (0) target = $region41
    $region40: #{multi_task_net_forward.1} parent=1 // pred_region
      %101 = dma.done [#allocation3], 128
    $region41: #{multi_task_net_forward.1} parent=1 // pred_fallthru
      _
    // Predicated region
    $region42: #{multi_task_net_forward.1} parent=1 // pred_check
      _
    $region43: #{multi_task_net_forward.1} parent=1 // pred_check_branch
      %103 = sbr.rel (0) target = $region45
    $region44: #{multi_task_net_forward.1} parent=1 // pred_region
      %105 = dma.done [#allocation5], 512
    $region45: #{multi_task_net_forward.1} parent=1 // pred_fallthru
      _
    // Predicated region
    $region46: #{multi_task_net_forward.1} parent=1 // pred_check
      _
    $region47: #{multi_task_net_forward.1} parent=1 // pred_check_branch
      %107 = sbr.rel (0) target = $region49
    $region48: #{multi_task_net_forward.1} parent=1 // pred_region
      %109 = dma.done [#allocation5], 32
    $region49: #{multi_task_net_forward.1} parent=1 // pred_fallthru
      _
    // Predicated region
    $region50: #{multi_task_net_forward.1} parent=1 // pred_check
      _
    $region51: #{multi_task_net_forward.1} parent=1 // pred_check_branch
      %111 = sbr.rel (0) target = $region53
    $region52: #{multi_task_net_forward.1} parent=1 // pred_region
      %113 = dma.done [#allocation8], 2048
    $region53: #{multi_task_net_forward.1} parent=1 // pred_fallthru
      _
    // Predicated region
    $region54: #{multi_task_net_forward.1} parent=1 // pred_check
      _
    $region55: #{multi_task_net_forward.1} parent=1 // pred_check_branch
      %115 = sbr.rel (0) target = $region57
    $region56: #{multi_task_net_forward.1} parent=1 // pred_region
      %117 = dma.done [#allocation8], 1024
    $region57: #{multi_task_net_forward.1} parent=1 // pred_fallthru
      _
    // Predicated region
    $region58: #{multi_task_net_forward.1} parent=1 // pred_check
      _
    $region59: #{multi_task_net_forward.1} parent=1 // pred_check_branch
      %119 = sbr.rel (0) target = $region61
    $region60: #{multi_task_net_forward.1} parent=1 // pred_region
      %121 = dma.done [#allocation11], 1024
    $region61: #{multi_task_net_forward.1} parent=1 // pred_fallthru
      _
    %v123 = vld [vmem:[#allocation2] sm:$0xff]
    %v124 = vpack.c.bf16 %v123, %v123
    %v125 = vld [vmem:[#allocation4] sm:$0xff]
    %v126 = vld [vmem:[#allocation4 + $0x8] sm:$0xff]
    %v127 = vld [vmem:[#allocation4 + $0x10] sm:$0xff]
    %v128 = vld [vmem:[#allocation4 + $0x18] sm:$0xff]
    %v129 = vld [vmem:[#allocation6] sm:$0x3]
    %v131 = vperm.slane %v129, 0
    %v132 = vperm.slane %v129, 1
    %v139 = vunpack.c.l.b16 %v125
    %v140 = vunpack.c.h.b16 %v125
    %v141 = vunpack.c.l.b16 %v126
    %v142 = vunpack.c.h.b16 %v126
    %v143 = vunpack.c.l.b16 %v127
    %v144 = vunpack.c.h.b16 %v127
    %v145 = vunpack.c.l.b16 %v128
    %v146 = vunpack.c.h.b16 %v128
    %v147 = vpack.c.b16 %v141, %v139
    %v148 = vpack.c.b16 %v142, %v140
    %v149 = vpack.c.b16 %v145, %v143
    %v150 = vpack.c.b16 %v146, %v144
    %vm155 = vcmask 261120
    %v157 = vsel %vm155, %v124, 0
    %159 = vmatpush.bf16.msra.mxu0 0
    %160 = vmatpush.bf16.msra.mxu0 0
    %161 = vmatpush.bf16.msra.mxu0 0
    %162 = vmatpush.bf16.msra.mxu0 0
    %163 = vmatpush.bf16.msra.mxu0 0
    %164 = vmatpush.bf16.msra.mxu0 0
    %165 = vmatpush.bf16.msra.mxu0 %v149
    %166 = vmatpush.bf16.msra.mxu0 %v147
    %167 = vmatmul.bf16.gmra.mxu0 %v157
    %v168 = vpop.f32.mrf.mxu0
    %v169 = vadd.f32 %v131, %v168
    %v170 = vpop.f32.mrf.mxu0
    %171 = vdwg.mxu0
    %172 = vmatpush.bf16.msra.mxu0 0
    %173 = vmatpush.bf16.msra.mxu0 0
    %174 = vmatpush.bf16.msra.mxu0 0
    %175 = vmatpush.bf16.msra.mxu0 0
    %176 = vmatpush.bf16.msra.mxu0 0
    %177 = vmatpush.bf16.msra.mxu0 0
    %178 = vmatpush.bf16.msra.mxu0 %v150
    %179 = vmatpush.bf16.msra.mxu0 %v148
    %180 = vmatmul.bf16.gmra.mxu0 %v157
    %v181 = vpop.f32.mrf.mxu0
    %v182 = vadd.f32 %v132, %v181
    %v183 = vpop.f32.mrf.mxu0
    %184 = vdwg.mxu0
    %v185 = vmax.f32 %v169, 0.0
    %v186 = vmax.f32 %v182, 0.0
    %v187 = vpack.c.bf16 %v185, %v185
    %v188 = vpack.c.bf16 %v186, %v186
    %v189 = vld [vmem:[#allocation7] sm:$0xf]
    %v190 = vld [vmem:[#allocation7 + $0x4] sm:$0xf]
    %v191 = vld [vmem:[#allocation7 + $0x8] sm:$0xf]
    %v192 = vld [vmem:[#allocation7 + $0xc] sm:$0xf]
    %v193 = vld [vmem:[#allocation7 + $0x10] sm:$0xf]
    %v194 = vld [vmem:[#allocation7 + $0x14] sm:$0xf]
    %v195 = vld [vmem:[#allocation7 + $0x18] sm:$0xf]
    %v196 = vld [vmem:[#allocation7 + $0x1c] sm:$0xf]
    %v197 = vld [vmem:[#allocation7 + $0x20] sm:$0xf]
    %v198 = vld [vmem:[#allocation7 + $0x24] sm:$0xf]
    %v199 = vld [vmem:[#allocation7 + $0x28] sm:$0xf]
    %v200 = vld [vmem:[#allocation7 + $0x2c] sm:$0xf]
    %v201 = vld [vmem:[#allocation7 + $0x30] sm:$0xf]
    %v202 = vld [vmem:[#allocation7 + $0x34] sm:$0xf]
    %v203 = vld [vmem:[#allocation7 + $0x38] sm:$0xf]
    %v204 = vld [vmem:[#allocation7 + $0x3c] sm:$0xf]
    %v205 = vld [vmem:[#allocation7 + $0x40] sm:$0xf]
    %v206 = vld [vmem:[#allocation7 + $0x44] sm:$0xf]
    %v207 = vld [vmem:[#allocation7 + $0x48] sm:$0xf]
    %v208 = vld [vmem:[#allocation7 + $0x4c] sm:$0xf]
    %v209 = vld [vmem:[#allocation7 + $0x50] sm:$0xf]
    %v210 = vld [vmem:[#allocation7 + $0x54] sm:$0xf]
    %v211 = vld [vmem:[#allocation7 + $0x58] sm:$0xf]
    %v212 = vld [vmem:[#allocation7 + $0x5c] sm:$0xf]
    %v213 = vld [vmem:[#allocation7 + $0x60] sm:$0xf]
    %v214 = vld [vmem:[#allocation7 + $0x64] sm:$0xf]
    %v215 = vld [vmem:[#allocation7 + $0x68] sm:$0xf]
    %v216 = vld [vmem:[#allocation7 + $0x6c] sm:$0xf]
    %v217 = vld [vmem:[#allocation7 + $0x70] sm:$0xf]
    %v218 = vld [vmem:[#allocation7 + $0x74] sm:$0xf]
    %v219 = vld [vmem:[#allocation7 + $0x78] sm:$0xf]
    %v220 = vld [vmem:[#allocation7 + $0x7c] sm:$0xf]
    %v221 = vld [vmem:[%s4] sm:$0x1]
    %v223 = vperm.slane %v221, 0
    %v257 = vunpack.c.l.b16 %v189
    %v258 = vunpack.c.l.b16 %v190
    %v259 = vunpack.c.l.b16 %v191
    %v260 = vunpack.c.l.b16 %v192
    %v261 = vunpack.c.l.b16 %v193
    %v262 = vunpack.c.l.b16 %v194
    %v263 = vunpack.c.l.b16 %v195
    %v264 = vunpack.c.l.b16 %v196
    %v265 = vunpack.c.l.b16 %v197
    %v266 = vunpack.c.l.b16 %v198
    %v267 = vunpack.c.l.b16 %v199
    %v268 = vunpack.c.l.b16 %v200
    %v269 = vunpack.c.l.b16 %v201
    %v270 = vunpack.c.l.b16 %v202
    %v271 = vunpack.c.l.b16 %v203
    %v272 = vunpack.c.l.b16 %v204
    %v273 = vunpack.c.l.b16 %v205
    %v274 = vunpack.c.l.b16 %v206
    %v275 = vunpack.c.l.b16 %v207
    %v276 = vunpack.c.l.b16 %v208
    %v277 = vunpack.c.l.b16 %v209
    %v278 = vunpack.c.l.b16 %v210
    %v279 = vunpack.c.l.b16 %v211
    %v280 = vunpack.c.l.b16 %v212
    %v281 = vunpack.c.l.b16 %v213
    %v282 = vunpack.c.l.b16 %v214
    %v283 = vunpack.c.l.b16 %v215
    %v284 = vunpack.c.l.b16 %v216
    %v285 = vunpack.c.l.b16 %v217
    %v286 = vunpack.c.l.b16 %v218
    %v287 = vunpack.c.l.b16 %v219
    %v288 = vunpack.c.l.b16 %v220
    %v289 = vpack.c.b16 %v258, %v257
    %v290 = vpack.c.b16 %v260, %v259
    %v291 = vpack.c.b16 %v262, %v261
    %v292 = vpack.c.b16 %v264, %v263
    %v293 = vpack.c.b16 %v266, %v265
    %v294 = vpack.c.b16 %v268, %v267
    %v295 = vpack.c.b16 %v270, %v269
    %v296 = vpack.c.b16 %v272, %v271
    %v297 = vpack.c.b16 %v274, %v273
    %v298 = vpack.c.b16 %v276, %v275
    %v299 = vpack.c.b16 %v278, %v277
    %v300 = vpack.c.b16 %v280, %v279
    %v301 = vpack.c.b16 %v282, %v281
    %v302 = vpack.c.b16 %v284, %v283
    %v303 = vpack.c.b16 %v286, %v285
    %v304 = vpack.c.b16 %v288, %v287
    %321 = vmatpush.bf16.msra.mxu0 %v296
    %322 = vmatpush.bf16.msra.mxu0 %v295
    %323 = vmatpush.bf16.msra.mxu0 %v294
    %324 = vmatpush.bf16.msra.mxu0 %v293
    %325 = vmatpush.bf16.msra.mxu0 %v292
    %326 = vmatpush.bf16.msra.mxu0 %v291
    %327 = vmatpush.bf16.msra.mxu0 %v290
    %328 = vmatpush.bf16.msra.mxu0 %v289
    %329 = vmatmul.bf16.gmra.mxu0 %v187
    %v330 = vpop.f32.mrf.mxu0
    %v331 = vadd.f32 %v223, %v330
    %v332 = vpop.f32.mrf.mxu0
    %333 = vdwg.mxu0
    %334 = vmatpush.bf16.msra.mxu0 %v304
    %335 = vmatpush.bf16.msra.mxu0 %v303
    %336 = vmatpush.bf16.msra.mxu0 %v302
    %337 = vmatpush.bf16.msra.mxu0 %v301
    %338 = vmatpush.bf16.msra.mxu0 %v300
    %339 = vmatpush.bf16.msra.mxu0 %v299
    %340 = vmatpush.bf16.msra.mxu0 %v298
    %341 = vmatpush.bf16.msra.mxu0 %v297
    %342 = vmatmul.bf16.gmra.mxu0 %v188
    %v343 = vpop.f32.mrf.mxu0
    %v344 = vadd.f32 %v331, %v343
    %v345 = vpop.f32.mrf.mxu0
    %346 = vdwg.mxu0
    %v347 = vmax.f32 %v344, 0.0
    %v348 = vpack.c.bf16 %v347, %v347
    %v349 = vld [vmem:[#allocation9] sm:$0xf]
    %v350 = vld [vmem:[#allocation9 + $0x4] sm:$0xf]
    %v351 = vld [vmem:[#allocation9 + $0x8] sm:$0xf]
    %v352 = vld [vmem:[#allocation9 + $0xc] sm:$0xf]
    %v353 = vld [vmem:[#allocation9 + $0x10] sm:$0xf]
    %v354 = vld [vmem:[#allocation9 + $0x14] sm:$0xf]
    %v355 = vld [vmem:[#allocation9 + $0x18] sm:$0xf]
    %v356 = vld [vmem:[#allocation9 + $0x1c] sm:$0xf]
    %v357 = vld [vmem:[#allocation9 + $0x20] sm:$0xf]
    %v358 = vld [vmem:[#allocation9 + $0x24] sm:$0xf]
    %v359 = vld [vmem:[#allocation9 + $0x28] sm:$0xf]
    %v360 = vld [vmem:[#allocation9 + $0x2c] sm:$0xf]
    %v361 = vld [vmem:[#allocation9 + $0x30] sm:$0xf]
    %v362 = vld [vmem:[#allocation9 + $0x34] sm:$0xf]
    %v363 = vld [vmem:[#allocation9 + $0x38] sm:$0xf]
    %v364 = vld [vmem:[#allocation9 + $0x3c] sm:$0xf]
    %v365 = vld [vmem:[%s6] sm:$0x1]
    %v367 = vperm.slane %v365, 0
    %v385 = vunpack.c.l.b16 %v349
    %v386 = vunpack.c.l.b16 %v350
    %v387 = vunpack.c.l.b16 %v351
    %v388 = vunpack.c.l.b16 %v352
    %v389 = vunpack.c.l.b16 %v353
    %v390 = vunpack.c.l.b16 %v354
    %v391 = vunpack.c.l.b16 %v355
    %v392 = vunpack.c.l.b16 %v356
    %v393 = vunpack.c.l.b16 %v357
    %v394 = vunpack.c.l.b16 %v358
    %v395 = vunpack.c.l.b16 %v359
    %v396 = vunpack.c.l.b16 %v360
    %v397 = vunpack.c.l.b16 %v361
    %v398 = vunpack.c.l.b16 %v362
    %v399 = vunpack.c.l.b16 %v363
    %v400 = vunpack.c.l.b16 %v364
    %v401 = vpack.c.b16 %v386, %v385
    %v402 = vpack.c.b16 %v388, %v387
    %v403 = vpack.c.b16 %v390, %v389
    %v404 = vpack.c.b16 %v392, %v391
    %v405 = vpack.c.b16 %v394, %v393
    %v406 = vpack.c.b16 %v396, %v395
    %v407 = vpack.c.b16 %v398, %v397
    %v408 = vpack.c.b16 %v400, %v399
    %417 = vmatpush.bf16.msra.mxu0 %v408
    %418 = vmatpush.bf16.msra.mxu0 %v407
    %419 = vmatpush.bf16.msra.mxu0 %v406
    %420 = vmatpush.bf16.msra.mxu0 %v405
    %421 = vmatpush.bf16.msra.mxu0 %v404
    %422 = vmatpush.bf16.msra.mxu0 %v403
    %423 = vmatpush.bf16.msra.mxu0 %v402
    %424 = vmatpush.bf16.msra.mxu0 %v401
    %425 = vmatmul.bf16.gmra.mxu0 %v348
    %v426 = vpop.f32.mrf.mxu0
    %v427 = vadd.f32 %v367, %v426
    %v428 = vpop.f32.mrf.mxu0
    %429 = vdwg.mxu0
    %v430 = vmax.f32 %v427, 0.0
    %v431 = vpack.c.bf16 %v430, %v430
    %v432 = vld [vmem:[#allocation10] sm:$0xf]
    %v433 = vld [vmem:[#allocation10 + $0x4] sm:$0xf]
    %v434 = vld [vmem:[#allocation10 + $0x8] sm:$0xf]
    %v435 = vld [vmem:[#allocation10 + $0xc] sm:$0xf]
    %v436 = vld [vmem:[#allocation10 + $0x10] sm:$0xf]
    %v437 = vld [vmem:[#allocation10 + $0x14] sm:$0xf]
    %v438 = vld [vmem:[#allocation10 + $0x18] sm:$0xf]
    %v439 = vld [vmem:[#allocation10 + $0x1c] sm:$0xf]
    %v440 = vld [vmem:[#allocation10 + $0x20] sm:$0xf]
    %v441 = vld [vmem:[#allocation10 + $0x24] sm:$0xf]
    %v442 = vld [vmem:[#allocation10 + $0x28] sm:$0xf]
    %v443 = vld [vmem:[#allocation10 + $0x2c] sm:$0xf]
    %v444 = vld [vmem:[#allocation10 + $0x30] sm:$0xf]
    %v445 = vld [vmem:[#allocation10 + $0x34] sm:$0xf]
    %v446 = vld [vmem:[#allocation10 + $0x38] sm:$0xf]
    %v447 = vld [vmem:[#allocation10 + $0x3c] sm:$0xf]
    %v448 = vld [vmem:[%s8] sm:$0x1]
    %v450 = vperm.slane %v448, 0
    %v468 = vunpack.c.l.b16 %v432
    %v469 = vunpack.c.l.b16 %v433
    %v470 = vunpack.c.l.b16 %v434
    %v471 = vunpack.c.l.b16 %v435
    %v472 = vunpack.c.l.b16 %v436
    %v473 = vunpack.c.l.b16 %v437
    %v474 = vunpack.c.l.b16 %v438
    %v475 = vunpack.c.l.b16 %v439
    %v476 = vunpack.c.l.b16 %v440
    %v477 = vunpack.c.l.b16 %v441
    %v478 = vunpack.c.l.b16 %v442
    %v479 = vunpack.c.l.b16 %v443
    %v480 = vunpack.c.l.b16 %v444
    %v481 = vunpack.c.l.b16 %v445
    %v482 = vunpack.c.l.b16 %v446
    %v483 = vunpack.c.l.b16 %v447
    %v484 = vpack.c.b16 %v469, %v468
    %v485 = vpack.c.b16 %v471, %v470
    %v486 = vpack.c.b16 %v473, %v472
    %v487 = vpack.c.b16 %v475, %v474
    %v488 = vpack.c.b16 %v477, %v476
    %v489 = vpack.c.b16 %v479, %v478
    %v490 = vpack.c.b16 %v481, %v480
    %v491 = vpack.c.b16 %v483, %v482
    %500 = vmatpush.bf16.msra.mxu0 %v491
    %501 = vmatpush.bf16.msra.mxu0 %v490
    %502 = vmatpush.bf16.msra.mxu0 %v489
    %503 = vmatpush.bf16.msra.mxu0 %v488
    %504 = vmatpush.bf16.msra.mxu0 %v487
    %505 = vmatpush.bf16.msra.mxu0 %v486
    %506 = vmatpush.bf16.msra.mxu0 %v485
    %507 = vmatpush.bf16.msra.mxu0 %v484
    %508 = vmatmul.bf16.gmra.mxu0 %v431
    %v509 = vpop.f32.mrf.mxu0
    %v510 = vadd.f32 %v450, %v509
    %v511 = vpop.f32.mrf.mxu0
    %512 = vdwg.mxu0
    %513 = vst [vmem:[%s9] sm:$0xff] %v510
    // Predicated region
    $region62: #{multi_task_net_forward.1} parent=1 // pred_check
      _
    $region63: #{multi_task_net_forward.1} parent=1 // pred_check_branch
      %515 = sbr.rel (0) target = $region65
    $region64: #{multi_task_net_forward.1} parent=1 // pred_region
      _
    $region65: #{multi_task_net_forward.1} parent=1 // pred_fallthru
      _
    // Predicated region
    $region66: #{multi_task_net_forward.1} parent=1 // pred_check
      _
    $region67: #{multi_task_net_forward.1} parent=1 // pred_check_branch
      %517 = sbr.rel (0) target = $region69
    $region68: #{multi_task_net_forward.1} parent=1 // pred_region
      _
    $region69: #{multi_task_net_forward.1} parent=1 // pred_fallthru
      _
    %518 = vsyncpa [#allocation3], 1
    %519 = vsyncpa [#allocation5], 1
    %520 = vsyncpa [#allocation8], 1
    %521 = vsyncpa [#allocation11], 1

</llo_original>
